<compile_context>
chip_gen: v7x
topology: tpu7x:2x2x1
jax: 0.10.0
libtpu: 0.0.40
codegen_flags: <defaults>
</compile_context>

<pallas_src>
import functools
import math

import jax
import jax.numpy as jnp
from jax import lax
from jax.experimental import pallas as pl
from jax.experimental.pallas import tpu as pltpu

LN_EPS = 1e-5

VMEM_BUDGET_BYTES = 10 * 1024 * 1024      # I/O blocks + intermediates budget
TARGET_STEP_HBM_BYTES = 2 * 1024 * 1024   # amortize ~0.35 us per grid step
MAX_ROWS_PER_STEP = 8192
VMEM_LIMIT_BYTES = 32 * 1024 * 1024       # safe on v5e/v6e/v7x


# ----------------------------------------------------------------------------- helpers
def _round_up(x, m):
    return ((x + m - 1) // m) * m


def _num_tensorcores():
    # Best effort: v7x has 2 TensorCores/chip, v5e/v6e have 1.  Only used for
    # tile-count heuristics, so a wrong guess is a minor perf issue, never a
    # correctness one.
    try:
        dev = jax.devices()[0]
        if dev.platform != "tpu":
            return 1
        kind = (getattr(dev, "device_kind", "") or "").lower()
        if "v7" in kind or "7x" in kind:
            return 2
    except Exception:
        pass
    return 1


def _even_steps(extent, tile, unit, num_cores):
    """v7x megacore: nudge a tiled axis to an even step count at small grids."""
    steps = pl.cdiv(extent, tile)
    if num_cores < 2 or steps <= 1 or steps % 2 == 0 or steps >= 16:
        return tile
    new_tile = max(unit, _round_up(pl.cdiv(extent, steps + 1), unit))
    if pl.cdiv(extent, new_tile) % 2 == 0:
        return new_tile
    return tile


def _choose_tiles(G, N, P, D, in_it, out_it, group, unit, num_cores):
    # VMEM accounting *includes* the 128-lane padding of the (rows, P) input
    # block (P=16 -> 8x inflation), the output block, double buffering, and the
    # main f32 intermediates (xln, y) the matmul forces to materialize.
    in_row_vmem = _round_up(P, 128) * in_it
    out_row_vmem = (_round_up(group * D, 128) * out_it) // group
    inter_row_vmem = 2 * _round_up(P, 128) * 4 + 2 * _round_up(D, 128) * 4
    vmem_rows = max(unit, VMEM_BUDGET_BYTES
                    // (2 * (in_row_vmem + out_row_vmem) + inter_row_vmem))
    hbm_row = P * in_it + D * out_it
    target_rows = max(unit, TARGET_STEP_HBM_BYTES // hbm_row)
    rows_per_step = min(vmem_rows, target_rows, MAX_ROWS_PER_STEP)

    total_rows = G * N
    if num_cores >= 2 and total_rows >= 2 * unit:
        # v7x: keep at least two grid steps so both TensorCores get work.
        rows_per_step = min(rows_per_step, _round_up(pl.cdiv(total_rows, 2), unit))
    rows_per_step = max(unit, (rows_per_step // unit) * unit)

    if N % unit == 0:
        tn = min(N, rows_per_step)
        gn = max(1, min(G, rows_per_step // tn))
    elif N >= unit:
        # Unaligned per-trace row count: keep gn = 1 so the in-kernel row
        # collapse stays tile-aligned; edge blocks cover the ragged tail.
        tn = max(unit, min((N // unit) * unit, rows_per_step))
        gn = 1
    else:
        tn = N          # single full-extent (possibly < 8-row) tile along N
        gn = 1

    g_tiles, n_tiles = pl.cdiv(G, gn), pl.cdiv(N, tn)
    if num_cores >= 2 and g_tiles * n_tiles > 1 and (g_tiles * n_tiles) % 2 == 1:
        if g_tiles == 1:
            tn = _even_steps(N, tn, unit, num_cores)
        elif n_tiles == 1:
            gn = _even_steps(G, gn, 1, num_cores)
    return gn, tn


# ----------------------------------------------------------------------------- kernel
def _patch_encoder_kernel(x_ref, w_ref, b_ref, g1_ref, be1_ref, g2_ref, be2_ref,
                          o_ref, *, group):
    # x_ref : [gn, tn, P] (trace axis squeezed)     w_ref : [P, D]
    # g1/be1: [1, P]      b/g2/be2 : [1, D]
    # o_ref : [gn, tn//group, group*D]   (lane-dense packed output rows)
    gn, tn, P = x_ref.shape
    rows = gn * tn
    # Collapse (batch-tile, row-tile); tn is sublane-aligned so this is a
    # layout-preserving no-op.
    x = x_ref[...].reshape(rows, P).astype(jnp.float32)

    # LayerNorm over patch_dim (biased variance, matching torch.nn.LayerNorm).
    mu1 = jnp.mean(x, axis=-1, keepdims=True)
    xc = x - mu1
    var1 = jnp.mean(xc * xc, axis=-1, keepdims=True)
    xln = xc * lax.rsqrt(var1 + LN_EPS)
    xln = xln * g1_ref[...].astype(jnp.float32) + be1_ref[...].astype(jnp.float32)

    # Linear on the MXU.  Operand dtype follows the weight dtype (bf16 weight
    # -> bf16 x bf16 with f32 accumulation); f32 weight stays f32.
    y = jnp.dot(xln.astype(w_ref.dtype), w_ref[...],
                preferred_element_type=jnp.float32)
    y = y + b_ref[...].astype(jnp.float32)

    # LayerNorm over d_model.
    mu2 = jnp.mean(y, axis=-1, keepdims=True)
    yc = y - mu2
    var2 = jnp.mean(yc * yc, axis=-1, keepdims=True)
    yln = yc * lax.rsqrt(var2 + LN_EPS)
    yln = yln * g2_ref[...].astype(jnp.float32) + be2_ref[...].astype(jnp.float32)

    # Lane-dense store: for d_model < 128 pack `group` consecutive patches per
    # 128-lane output row (unpacked outside by a free row-major reshape).
    d = yln.shape[-1]
    o_ref[...] = yln.reshape(gn, tn // group, group * d).astype(o_ref.dtype)


# ----------------------------------------------------------------------------- wrapper
def patch_encode_pallas(xr, w, b, g1, be1, g2, be2, *, trace_index, out_dtype=None):
    """xr: [G, T, N, P]; selects t = trace_index; returns [G, N, D]."""
    G, T, N, P = xr.shape
    D = w.shape[1]
    out_dtype = jnp.dtype(out_dtype if out_dtype is not None else xr.dtype)
    in_it = jnp.dtype(xr.dtype).itemsize
    out_it = out_dtype.itemsize

    # Lane-dense output packing (only when it divides cleanly; otherwise the
    # plain D-lane store is still correct, just masked).
    group = 1
    if D < 128 and 128 % D == 0 and N % (128 // D) == 0:
        group = 128 // D
    sub_unit = max(8, 32 // min(in_it, out_it))
    unit = max(sub_unit, 8 * group)

    num_cores = _num_tensorcores()
    gn, tn = _choose_tiles(G, N, P, D, in_it, out_it, group, unit, num_cores)
    g_tiles, n_tiles = pl.cdiv(G, gn), pl.cdiv(N, tn)
    Np = N // group

    kernel = pl.pallas_call(
        functools.partial(_patch_encoder_kernel, group=group),
        out_shape=jax.ShapeDtypeStruct((G, Np, group * D), out_dtype),
        grid_spec=pl.GridSpec(
            grid=(g_tiles, n_tiles),
            in_specs=[
                # trace_id slice folded into the index map (no HBM slice copy);
                # the T axis is squeezed out of the kernel ref.
                pl.BlockSpec((gn, None, tn, P),
                             lambda gi, ni: (gi, trace_index, ni, 0)),
                pl.BlockSpec((P, D), lambda gi, ni: (0, 0)),   # linear weight
                pl.BlockSpec((1, D), lambda gi, ni: (0, 0)),   # linear bias
                pl.BlockSpec((1, P), lambda gi, ni: (0, 0)),   # LN1 gamma
                pl.BlockSpec((1, P), lambda gi, ni: (0, 0)),   # LN1 beta
                pl.BlockSpec((1, D), lambda gi, ni: (0, 0)),   # LN2 gamma
                pl.BlockSpec((1, D), lambda gi, ni: (0, 0)),   # LN2 beta
            ],
            out_specs=pl.BlockSpec((gn, tn // group, group * D),
                                   lambda gi, ni: (gi, ni, 0)),
        ),
        compiler_params=pltpu.CompilerParams(
            dimension_semantics=("parallel", "parallel"),
            vmem_limit_bytes=VMEM_LIMIT_BYTES,
        ),
        cost_estimate=pl.CostEstimate(
            flops=int(2 * G * N * P * D + 10 * G * N * (P + D)),
            transcendentals=int(2 * G * N),
            bytes_accessed=int(G * N * (P * in_it + D * out_it)
                               + (P * D + 2 * P + 3 * D) * 4),
        ),
    )
    out = kernel(xr, w, b, g1, be1, g2, be2)
    return out.reshape(G, N, D)     # free: packed rows are row-major contiguous


def rearrange_patches(trace, patch_len):
    # einops 'b ... c (n l) -> b ... n (l c)'
    *lead, C, L = trace.shape
    N = L // patch_len
    t = trace.reshape(*lead, C, N, patch_len)
    nl = len(lead)
    t = jnp.transpose(t, tuple(range(nl)) + (nl + 1, nl + 2, nl))
    return t.reshape(*lead, N, patch_len * C)


@functools.partial(jax.jit, static_argnames=("trace_id", "patch_len", "out_dtype"))
def linear_patch_encoder(x, params, *, trace_id=0, patch_len=16, out_dtype=None):
    """x: [B, T, C, N*patch_len] (4-D) or [B, E, T, C, N*patch_len] (5-D)."""
    lead = x.shape[:-3]
    T, C, L = x.shape[-3:]
    N = L // patch_len
    G = int(math.prod(lead)) if lead else 1

    if C == 1:
        # Fused path: the trace_id slice is NOT materialized; this reshape is a
        # free row-major view and only the trace_id rows are DMA'd by the kernel.
        xr = x.reshape(G, T, N, patch_len)
        t_index = trace_id
    else:
        # TODO(synk): fold the (l c) interleave for in_channel > 1 into the
        # BlockSpec/index_map instead of materializing this transpose in HBM.
        trace = lax.index_in_dim(x, trace_id, axis=x.ndim - 3, keepdims=False)
        patches = rearrange_patches(trace, patch_len)       # [..., N, patch_len*C]
        xr = patches.reshape(1, 1, G * N, patch_len * C)
        t_index = 0

    out = patch_encode_pallas(
        xr, params["w"], params["b"],
        params["ln1_g"], params["ln1_b"],
        params["ln2_g"], params["ln2_b"],
        trace_index=t_index, out_dtype=out_dtype)
    D = params["w"].shape[1]
    return out.reshape(*lead, N, D)


# ----------------------------------------------------------------------------- reference
def _reference(x, params, *, trace_id=0, patch_len=16):
    trace = lax.index_in_dim(x, trace_id, axis=x.ndim - 3, keepdims=False)
    p = rearrange_patches(trace, patch_len).astype(jnp.float32)
    g1, b1 = params["ln1_g"][0], params["ln1_b"][0]
    g2, b2 = params["ln2_g"][0], params["ln2_b"][0]
    w, b = params["w"], params["b"][0]
    mu = p.mean(-1, keepdims=True)
    var = ((p - mu) ** 2).mean(-1, keepdims=True)
    p = (p - mu) * lax.rsqrt(var + LN_EPS) * g1 + b1
    y = jnp.dot(p, w, precision=lax.Precision.HIGHEST) + b
    mu = y.mean(-1, keepdims=True)
    var = ((y - mu) ** 2).mean(-1, keepdims=True)
    return (y - mu) * lax.rsqrt(var + LN_EPS) * g2 + b2


# ----------------------------------------------------------------------------- demo
if __name__ == "__main__":
    keys = iter(jax.random.split(jax.random.PRNGKey(0), 16))

    def make_params(kp, patch_dim, d_model, w_dtype=jnp.float32):
        kw, kb, kg1, kb1, kg2, kb2 = jax.random.split(kp, 6)
        return {
            "w": (jax.random.normal(kw, (patch_dim, d_model), jnp.float32)
                  / jnp.sqrt(patch_dim)).astype(w_dtype),
            "b": jax.random.normal(kb, (1, d_model), jnp.float32) * 0.02,
            "ln1_g": 1.0 + 0.1 * jax.random.normal(kg1, (1, patch_dim), jnp.float32),
            "ln1_b": 0.1 * jax.random.normal(kb1, (1, patch_dim), jnp.float32),
            "ln2_g": 1.0 + 0.1 * jax.random.normal(kg2, (1, d_model), jnp.float32),
            "ln2_b": 0.1 * jax.random.normal(kb2, (1, d_model), jnp.float32),
        }

    def check(name, x, params, trace_id, patch_len, atol, expect_dtype=None):
        out = jax.block_until_ready(
            linear_patch_encoder(x, params, trace_id=trace_id, patch_len=patch_len))
        if expect_dtype is not None:
            assert out.dtype == jnp.dtype(expect_dtype), (name, out.dtype)
        ref_params = {kk: vv.astype(jnp.float32) for kk, vv in params.items()}
        ref = _reference(x.astype(jnp.float32), ref_params,
                         trace_id=trace_id, patch_len=patch_len)
        assert out.shape == ref.shape, (name, out.shape, ref.shape)
        err = jnp.max(jnp.abs(out.astype(jnp.float32) - ref))
        assert jnp.allclose(out.astype(jnp.float32), ref, atol=atol, rtol=atol), \
            f"{name}: max err {err}"

    # A: 4-D, in_channel=1, d_model=128 (module defaults), trace_id=1.
    pA = make_params(next(keys), 16, 128)
    xA = jax.random.normal(next(keys), (2, 3, 1, 64 * 16), jnp.float32)
    check("A(f32, d=128)", xA, pA, 1, 16, 2e-4)

    # B: 5-D input + ragged patch count (N=10) -> edge blocks, no pad copy.
    xB = jax.random.normal(next(keys), (2, 2, 3, 1, 10 * 16), jnp.float32)
    check("B(5D ragged)", xB, pA, 2, 16, 2e-4)

    # C: d_model=32 -> lane-dense packed output (4 patches per 128-lane row).
    pC = make_params(next(keys), 16, 32)
    xC = jax.random.normal(next(keys), (2, 2, 1, 64 * 16), jnp.float32)
    check("C(d=32 packed)", xC, pC, 0, 16, 2e-4)

    # D: bf16 activations + bf16 weight (bf16 MXU operands, f32 LN math,
    #    bf16 output -> halves output HBM traffic).
    pD = dict(pA, w=pA["w"].astype(jnp.bfloat16))
    check("D(bf16)", xA.astype(jnp.bfloat16), pD, 1, 16, 3e-2,
          expect_dtype=jnp.bfloat16)

    # E: in_channel=2 fallback ((l c) interleave materialized, flat row path).
    pE = make_params(next(keys), 32, 128)
    xE = jax.random.normal(next(keys), (2, 2, 2, 8 * 16), jnp.float32)
    check("E(C=2 fallback)", xE, pE, 1, 16, 2e-4)

    # F: larger row count -> multi-step grid with ~2.5k-row tiles + edge blocks.
    xF = jax.random.normal(next(keys), (2, 2, 1, 4096 * 16), jnp.float32)
    check("F(large)", xF, pA, 0, 16, 2e-4)

    print("KERNEL_OK")
</pallas_src>

<mosaic_0001>
module attributes {stable_mosaic.version = 11 : i64} {
  func.func @_patch_encoder_kernel(%arg0: i32, %arg1: i32, %arg2: memref<2x1x64x16xf32, #tpu.memory_space<vmem>>, %arg3: memref<16x128xf32, #tpu.memory_space<vmem>>, %arg4: memref<1x128xf32, #tpu.memory_space<vmem>>, %arg5: memref<1x16xf32, #tpu.memory_space<vmem>>, %arg6: memref<1x16xf32, #tpu.memory_space<vmem>>, %arg7: memref<1x128xf32, #tpu.memory_space<vmem>>, %arg8: memref<1x128xf32, #tpu.memory_space<vmem>>, %arg9: memref<2x64x128xf32, #tpu.memory_space<vmem>>) attributes {dimension_semantics = [#tpu.dimension_semantics<parallel>, #tpu.dimension_semantics<parallel>], iteration_bounds = array<i64: 1, 1>, scalar_prefetch = 0 : i64, scratch_operands = 0 : i64, tpu.core_type = #tpu.core_type<tc>, window_params = [{transform_indices = @transform_0, window_bounds = array<i64: 2, 1, 64, 16>}, {pipeline_mode = #tpu.pipeline_mode<synchronous>, transform_indices = @transform_1, window_bounds = array<i64: 16, 128>}, {pipeline_mode = #tpu.pipeline_mode<synchronous>, transform_indices = @transform_2, window_bounds = array<i64: 1, 128>}, {pipeline_mode = #tpu.pipeline_mode<synchronous>, transform_indices = @transform_3, window_bounds = array<i64: 1, 16>}, {pipeline_mode = #tpu.pipeline_mode<synchronous>, transform_indices = @transform_4, window_bounds = array<i64: 1, 16>}, {pipeline_mode = #tpu.pipeline_mode<synchronous>, transform_indices = @transform_5, window_bounds = array<i64: 1, 128>}, {pipeline_mode = #tpu.pipeline_mode<synchronous>, transform_indices = @transform_6, window_bounds = array<i64: 1, 128>}, {transform_indices = @transform_7, window_bounds = array<i64: 2, 64, 128>}]} {
    %c0 = arith.constant 0 : index
    %c0_0 = arith.constant 0 : index
    %c0_1 = arith.constant 0 : index
    %c0_2 = arith.constant 0 : index
    %0 = vector.load %arg2[%c0, %c0_0, %c0_1, %c0_2] : memref<2x1x64x16xf32, #tpu.memory_space<vmem>>, vector<2x1x64x16xf32>
    %1 = vector.shape_cast %0 : vector<2x1x64x16xf32> to vector<2x64x16xf32>
    %2 = vector.shape_cast %1 : vector<2x64x16xf32> to vector<128x16xf32>
    %cst = arith.constant dense<0.000000e+00> : vector<128xf32>
    %3 = vector.multi_reduction <add>, %2, %cst [1] : vector<128x16xf32> to vector<128xf32>
    %4 = vector.shape_cast %3 : vector<128xf32> to vector<128x1xf32>
    %cst_3 = arith.constant 1.600000e+01 : f32
    %5 = vector.broadcast %cst_3 : f32 to vector<128x1xf32>
    %6 = arith.divf %4, %5 : vector<128x1xf32>
    %7 = vector.broadcast %6 : vector<128x1xf32> to vector<128x16xf32>
    %8 = arith.subf %2, %7 : vector<128x16xf32>
    %9 = arith.mulf %8, %8 : vector<128x16xf32>
    %cst_4 = arith.constant dense<0.000000e+00> : vector<128xf32>
    %10 = vector.multi_reduction <add>, %9, %cst_4 [1] : vector<128x16xf32> to vector<128xf32>
    %11 = vector.shape_cast %10 : vector<128xf32> to vector<128x1xf32>
    %cst_5 = arith.constant 1.600000e+01 : f32
    %12 = vector.broadcast %cst_5 : f32 to vector<128x1xf32>
    %13 = arith.divf %11, %12 : vector<128x1xf32>
    %cst_6 = arith.constant 9.99999974E-6 : f32
    %14 = vector.broadcast %cst_6 : f32 to vector<128x1xf32>
    %15 = arith.addf %13, %14 : vector<128x1xf32>
    %16 = math.rsqrt %15 : vector<128x1xf32>
    %17 = vector.broadcast %16 : vector<128x1xf32> to vector<128x16xf32>
    %18 = arith.mulf %8, %17 : vector<128x16xf32>
    %c0_7 = arith.constant 0 : index
    %c0_8 = arith.constant 0 : index
    %19 = vector.load %arg5[%c0_7, %c0_8] : memref<1x16xf32, #tpu.memory_space<vmem>>, vector<1x16xf32>
    %20 = vector.broadcast %19 : vector<1x16xf32> to vector<128x16xf32>
    %21 = arith.mulf %18, %20 : vector<128x16xf32>
    %c0_9 = arith.constant 0 : index
    %c0_10 = arith.constant 0 : index
    %22 = vector.load %arg6[%c0_9, %c0_10] : memref<1x16xf32, #tpu.memory_space<vmem>>, vector<1x16xf32>
    %23 = vector.broadcast %22 : vector<1x16xf32> to vector<128x16xf32>
    %24 = arith.addf %21, %23 : vector<128x16xf32>
    %c0_11 = arith.constant 0 : index
    %c0_12 = arith.constant 0 : index
    %25 = vector.load %arg3[%c0_11, %c0_12] : memref<16x128xf32, #tpu.memory_space<vmem>>, vector<16x128xf32>
    %cst_13 = arith.constant dense<0.000000e+00> : vector<128x128xf32>
    %26 = tpu.matmul %24, %25, %cst_13 {dimension_numbers = #tpu.dot_dimension_numbers<[1], [0], [0], [1], [0, 0, 1, 1], [], []>} : vector<128x16xf32>, vector<16x128xf32>, vector<128x128xf32> -> vector<128x128xf32>
    %c0_14 = arith.constant 0 : index
    %c0_15 = arith.constant 0 : index
    %27 = vector.load %arg4[%c0_14, %c0_15] : memref<1x128xf32, #tpu.memory_space<vmem>>, vector<1x128xf32>
    %28 = vector.broadcast %27 : vector<1x128xf32> to vector<128x128xf32>
    %29 = arith.addf %26, %28 : vector<128x128xf32>
    %cst_16 = arith.constant dense<0.000000e+00> : vector<128xf32>
    %30 = vector.multi_reduction <add>, %29, %cst_16 [1] : vector<128x128xf32> to vector<128xf32>
    %31 = vector.shape_cast %30 : vector<128xf32> to vector<128x1xf32>
    %cst_17 = arith.constant 1.280000e+02 : f32
    %32 = vector.broadcast %cst_17 : f32 to vector<128x1xf32>
    %33 = arith.divf %31, %32 : vector<128x1xf32>
    %34 = vector.broadcast %33 : vector<128x1xf32> to vector<128x128xf32>
    %35 = arith.subf %29, %34 : vector<128x128xf32>
    %36 = arith.mulf %35, %35 : vector<128x128xf32>
    %cst_18 = arith.constant dense<0.000000e+00> : vector<128xf32>
    %37 = vector.multi_reduction <add>, %36, %cst_18 [1] : vector<128x128xf32> to vector<128xf32>
    %38 = vector.shape_cast %37 : vector<128xf32> to vector<128x1xf32>
    %cst_19 = arith.constant 1.280000e+02 : f32
    %39 = vector.broadcast %cst_19 : f32 to vector<128x1xf32>
    %40 = arith.divf %38, %39 : vector<128x1xf32>
    %cst_20 = arith.constant 9.99999974E-6 : f32
    %41 = vector.broadcast %cst_20 : f32 to vector<128x1xf32>
    %42 = arith.addf %40, %41 : vector<128x1xf32>
    %43 = math.rsqrt %42 : vector<128x1xf32>
    %44 = vector.broadcast %43 : vector<128x1xf32> to vector<128x128xf32>
    %45 = arith.mulf %35, %44 : vector<128x128xf32>
    %c0_21 = arith.constant 0 : index
    %c0_22 = arith.constant 0 : index
    %46 = vector.load %arg7[%c0_21, %c0_22] : memref<1x128xf32, #tpu.memory_space<vmem>>, vector<1x128xf32>
    %47 = vector.broadcast %46 : vector<1x128xf32> to vector<128x128xf32>
    %48 = arith.mulf %45, %47 : vector<128x128xf32>
    %c0_23 = arith.constant 0 : index
    %c0_24 = arith.constant 0 : index
    %49 = vector.load %arg8[%c0_23, %c0_24] : memref<1x128xf32, #tpu.memory_space<vmem>>, vector<1x128xf32>
    %50 = vector.broadcast %49 : vector<1x128xf32> to vector<128x128xf32>
    %51 = arith.addf %48, %50 : vector<128x128xf32>
    %52 = vector.shape_cast %51 : vector<128x128xf32> to vector<2x64x128xf32>
    %c0_25 = arith.constant 0 : index
    %c0_26 = arith.constant 0 : index
    %c0_27 = arith.constant 0 : index
    %53 = vector.load %arg9[%c0_25, %c0_26, %c0_27] : memref<2x64x128xf32, #tpu.memory_space<vmem>>, vector<2x64x128xf32>
    tpu.vector_store %arg9[%c0_25, %c0_26, %c0_27], %52 {strides = array<i32>} : memref<2x64x128xf32, #tpu.memory_space<vmem>>, vector<2x64x128xf32>,
    return
  }
  func.func @transform_0(%arg0: i32, %arg1: i32) -> (i32, i32, i32, i32) {
    %c1_i32 = arith.constant 1 : i32
    %c0_i32 = arith.constant 0 : i32
    %c0_i32_0 = arith.constant 0 : i32
    return %arg0, %c1_i32, %arg1, %c0_i32 : i32, i32, i32, i32
  }
  func.func @transform_1(%arg0: i32, %arg1: i32) -> (i32, i32) {
    %c0_i32 = arith.constant 0 : i32
    %c0_i32_0 = arith.constant 0 : i32
    %c0_i32_1 = arith.constant 0 : i32
    return %c0_i32, %c0_i32_0 : i32, i32
  }
  func.func @transform_2(%arg0: i32, %arg1: i32) -> (i32, i32) {
    %c0_i32 = arith.constant 0 : i32
    %c0_i32_0 = arith.constant 0 : i32
    %c0_i32_1 = arith.constant 0 : i32
    return %c0_i32, %c0_i32_0 : i32, i32
  }
  func.func @transform_3(%arg0: i32, %arg1: i32) -> (i32, i32) {
    %c0_i32 = arith.constant 0 : i32
    %c0_i32_0 = arith.constant 0 : i32
    %c0_i32_1 = arith.constant 0 : i32
    return %c0_i32, %c0_i32_0 : i32, i32
  }
  func.func @transform_4(%arg0: i32, %arg1: i32) -> (i32, i32) {
    %c0_i32 = arith.constant 0 : i32
    %c0_i32_0 = arith.constant 0 : i32
    %c0_i32_1 = arith.constant 0 : i32
    return %c0_i32, %c0_i32_0 : i32, i32
  }
  func.func @transform_5(%arg0: i32, %arg1: i32) -> (i32, i32) {
    %c0_i32 = arith.constant 0 : i32
    %c0_i32_0 = arith.constant 0 : i32
    %c0_i32_1 = arith.constant 0 : i32
    return %c0_i32, %c0_i32_0 : i32, i32
  }
  func.func @transform_6(%arg0: i32, %arg1: i32) -> (i32, i32) {
    %c0_i32 = arith.constant 0 : i32
    %c0_i32_0 = arith.constant 0 : i32
    %c0_i32_1 = arith.constant 0 : i32
    return %c0_i32, %c0_i32_0 : i32, i32
  }
  func.func @transform_7(%arg0: i32, %arg1: i32) -> (i32, i32, i32) {
    %c0_i32 = arith.constant 0 : i32
    %c0_i32_0 = arith.constant 0 : i32
    return %arg0, %arg1, %c0_i32 : i32, i32, i32
  }
}

</mosaic_0001>

<llo_original>
// kernel: linear_patch_encoder.1
$region0: #{linear_patch_encoder.1}
  #allocation0 [shape = 'u32[]', space=smem, size = 0x4, offset = 0x4, fixed_abs, tag = 'smem constant byte address 0x4 - core index']
  #allocation1 [shape = 'u32[144,128]{1,0:T(1,128)}', space=vmem, size = 0x12000, scoped, tag = 'internal scratch']
  %s0 = inlined_call_operand.vmem [shape: f32[2,3,64,16], index: 0, kind: input, shape index: {}]
  %s1 = inlined_call_operand.vmem [shape: f32[16,128], index: 1, kind: input, shape index: {}]
  %s2 = inlined_call_operand.vmem [shape: f32[1,128], index: 2, kind: input, shape index: {}]
  %s3 = inlined_call_operand.vmem [shape: f32[1,16], index: 3, kind: input, shape index: {}]
  %s4 = inlined_call_operand.vmem [shape: f32[1,16], index: 4, kind: input, shape index: {}]
  %s5 = inlined_call_operand.vmem [shape: f32[1,128], index: 5, kind: input, shape index: {}]
  %s6 = inlined_call_operand.vmem [shape: f32[1,128], index: 6, kind: input, shape index: {}]
  %s7 = inlined_call_operand.hbm [shape: f32[2,64,128], index: 7, kind: output, shape index: {}]
  %s8 = sld [smem:[#allocation0]]
  $region76: #{linear_patch_encoder.1} parent=0
    _
  %s10 = ssub.s32 1, %s8
  %s11 = scalar_select 0, %s10, %s8
  $region1: #{linear_patch_encoder.1} parent=0
    #allocation2 [shape = 'u8[65536]{0}', space=vmem, size = 0x10000, scoped, tag = 'input window, operand 0, single buffered']
    #allocation3 [shape = 'u8[65536]{0}', space=vmem, size = 0x10000, scoped, tag = 'output window, operand 0, single buffered']
    #allocation4 [shape = 's32[1]{0}', space=sflag, size = 0x4, scoped, tag = 'scoped memory for linear_patch_encoder.1']
    %12 = vsyncpa [#allocation4], 0
    // Predicated region
    $region2: #{linear_patch_encoder.1} parent=1 // pred_check
      _
    $region3: #{linear_patch_encoder.1} parent=1 // pred_check_branch
      %14 = sbr.rel (0) target = $region5
    $region4: #{linear_patch_encoder.1} parent=1 // pred_region
      %s15 = scalar_lea.vmem %s0, 64
      // Predicated region
      $region6: #{linear_patch_encoder.1} parent=4 // pred_check
        _
      $region7: #{linear_patch_encoder.1} parent=4 // pred_check_branch
        %17 = sbr.rel (0) target = $region9
      $region8: #{linear_patch_encoder.1} parent=4 // pred_region
        // Predicated region
        $region10: #{linear_patch_encoder.1} parent=8 // pred_check
          _
        $region11: #{linear_patch_encoder.1} parent=8 // pred_check_branch
          %19 = sbr.rel (0) target = $region13
        $region12: #{linear_patch_encoder.1} parent=8 // pred_region
          // Predicated region
          $region25: #{linear_patch_encoder.1} parent=12 // pred_check
            _
          $region26: #{linear_patch_encoder.1} parent=12 // pred_check_branch
            %64 = sbr.rel (0) target = $region28
          $region27: #{linear_patch_encoder.1} parent=12 // pred_region
            loop: start=0, step=1, limit=1
            $region29: #{linear_patch_encoder.1} parent=27 // loop_pre_header
              _
            $region30: #{linear_patch_encoder.1} parent=27 // loop_header
              %s66 = sphi 0, %s70
              %p67 = scmp.ge.s32.totalorder %s66, 1
              %s71 = sphi %s15, %s15
              %s72 = sphi [#allocation2], [#allocation2]
            $region31: #{linear_patch_encoder.1} parent=27 // loop_header_branch
              %69 = sbr.rel (%p67) target = $region35
            $region32: #{linear_patch_encoder.1} parent=27 // loop_body
              %v73 = vld [vmem:[%s71] sm:$0xff]
              %74 = vst [vmem:[%s72] sm:$0xff] %v73
              %v75 = vld [vmem:[%s71 + $0x8] sm:$0xff]
              %76 = vst [vmem:[%s72 + $0x8] sm:$0xff] %v75
              %v77 = vld [vmem:[%s71 + $0x10] sm:$0xff]
              %78 = vst [vmem:[%s72 + $0x10] sm:$0xff] %v77
              %v79 = vld [vmem:[%s71 + $0x18] sm:$0xff]
              %80 = vst [vmem:[%s72 + $0x18] sm:$0xff] %v79
              %v81 = vld [vmem:[%s71 + $0x20] sm:$0xff]
              %82 = vst [vmem:[%s72 + $0x20] sm:$0xff] %v81
              %v83 = vld [vmem:[%s71 + $0x28] sm:$0xff]
              %84 = vst [vmem:[%s72 + $0x28] sm:$0xff] %v83
              %v85 = vld [vmem:[%s71 + $0x30] sm:$0xff]
              %86 = vst [vmem:[%s72 + $0x30] sm:$0xff] %v85
              %v87 = vld [vmem:[%s71 + $0x38] sm:$0xff]
              %88 = vst [vmem:[%s72 + $0x38] sm:$0xff] %v87
              %v89 = vld [vmem:[%s71 + $0xc0] sm:$0xff]
              %90 = vst [vmem:[%s72 + $0x40] sm:$0xff] %v89
              %v91 = vld [vmem:[%s71 + $0xc8] sm:$0xff]
              %92 = vst [vmem:[%s72 + $0x48] sm:$0xff] %v91
              %v93 = vld [vmem:[%s71 + $0xd0] sm:$0xff]
              %94 = vst [vmem:[%s72 + $0x50] sm:$0xff] %v93
              %v95 = vld [vmem:[%s71 + $0xd8] sm:$0xff]
              %96 = vst [vmem:[%s72 + $0x58] sm:$0xff] %v95
              %v97 = vld [vmem:[%s71 + $0xe0] sm:$0xff]
              %98 = vst [vmem:[%s72 + $0x60] sm:$0xff] %v97
              %v99 = vld [vmem:[%s71 + $0xe8] sm:$0xff]
              %100 = vst [vmem:[%s72 + $0x68] sm:$0xff] %v99
              %v101 = vld [vmem:[%s71 + $0xf0] sm:$0xff]
              %102 = vst [vmem:[%s72 + $0x70] sm:$0xff] %v101
              %v103 = vld [vmem:[%s71 + $0xf8] sm:$0xff]
              %104 = vst [vmem:[%s72 + $0x78] sm:$0xff] %v103
            $region33: #{linear_patch_encoder.1} parent=27 // loop_footer
              %s70 = sadd.s32 1, %s66
            $region34: #{linear_patch_encoder.1} parent=27 // loop_footer_branch
              %65 = sbr.rel target = $region30
            $region35: #{linear_patch_encoder.1} parent=27 // loop_exit
              _
          $region28: #{linear_patch_encoder.1} parent=12 // pred_fallthru
            _
          // Predicated region
          $region36: #{linear_patch_encoder.1} parent=12 // pred_check
            _
          $region37: #{linear_patch_encoder.1} parent=12 // pred_check_branch
            %106 = sbr.rel target = $region39
          $region38: #{linear_patch_encoder.1} parent=12 // pred_region
            _
          $region39: #{linear_patch_encoder.1} parent=12 // pred_fallthru
            _
        $region13: #{linear_patch_encoder.1} parent=8 // pred_fallthru
          _
        // Predicated region
        $region14: #{linear_patch_encoder.1} parent=8 // pred_check
          _
        $region15: #{linear_patch_encoder.1} parent=8 // pred_check_branch
          %21 = sbr.rel target = $region17
        $region16: #{linear_patch_encoder.1} parent=8 // pred_region
          loop: start=0, step=1, limit=1
          $region18: #{linear_patch_encoder.1} parent=16 // loop_pre_header
            _
          $region19: #{linear_patch_encoder.1} parent=16 // loop_header
            %s24 = sphi 0, %s28
            %p25 = scmp.ge.s32.totalorder %s24, 1
            %s29 = sphi %s15, %s15
            %s30 = sphi [#allocation2], [#allocation2]
          $region20: #{linear_patch_encoder.1} parent=16 // loop_header_branch
            %27 = sbr.rel (%p25) target = $region24
          $region21: #{linear_patch_encoder.1} parent=16 // loop_body
            %v31 = vld [vmem:[%s29] sm:$0xff]
            %32 = vst [vmem:[%s30] sm:$0xff] %v31
            %v33 = vld [vmem:[%s29 + $0x8] sm:$0xff]
            %34 = vst [vmem:[%s30 + $0x8] sm:$0xff] %v33
            %v35 = vld [vmem:[%s29 + $0x10] sm:$0xff]
            %36 = vst [vmem:[%s30 + $0x10] sm:$0xff] %v35
            %v37 = vld [vmem:[%s29 + $0x18] sm:$0xff]
            %38 = vst [vmem:[%s30 + $0x18] sm:$0xff] %v37
            %v39 = vld [vmem:[%s29 + $0x20] sm:$0xff]
            %40 = vst [vmem:[%s30 + $0x20] sm:$0xff] %v39
            %v41 = vld [vmem:[%s29 + $0x28] sm:$0xff]
            %42 = vst [vmem:[%s30 + $0x28] sm:$0xff] %v41
            %v43 = vld [vmem:[%s29 + $0x30] sm:$0xff]
            %44 = vst [vmem:[%s30 + $0x30] sm:$0xff] %v43
            %v45 = vld [vmem:[%s29 + $0x38] sm:$0xff]
            %46 = vst [vmem:[%s30 + $0x38] sm:$0xff] %v45
            %v47 = vld [vmem:[%s29 + $0xc0] sm:$0xff]
            %48 = vst [vmem:[%s30 + $0x40] sm:$0xff] %v47
            %v49 = vld [vmem:[%s29 + $0xc8] sm:$0xff]
            %50 = vst [vmem:[%s30 + $0x48] sm:$0xff] %v49
            %v51 = vld [vmem:[%s29 + $0xd0] sm:$0xff]
            %52 = vst [vmem:[%s30 + $0x50] sm:$0xff] %v51
            %v53 = vld [vmem:[%s29 + $0xd8] sm:$0xff]
            %54 = vst [vmem:[%s30 + $0x58] sm:$0xff] %v53
            %v55 = vld [vmem:[%s29 + $0xe0] sm:$0xff]
            %56 = vst [vmem:[%s30 + $0x60] sm:$0xff] %v55
            %v57 = vld [vmem:[%s29 + $0xe8] sm:$0xff]
            %58 = vst [vmem:[%s30 + $0x68] sm:$0xff] %v57
            %v59 = vld [vmem:[%s29 + $0xf0] sm:$0xff]
            %60 = vst [vmem:[%s30 + $0x70] sm:$0xff] %v59
            %v61 = vld [vmem:[%s29 + $0xf8] sm:$0xff]
            %62 = vst [vmem:[%s30 + $0x78] sm:$0xff] %v61
          $region22: #{linear_patch_encoder.1} parent=16 // loop_footer
            %s28 = sadd.s32 1, %s24
          $region23: #{linear_patch_encoder.1} parent=16 // loop_footer_branch
            %23 = sbr.rel target = $region19
          $region24: #{linear_patch_encoder.1} parent=16 // loop_exit
            _
        $region17: #{linear_patch_encoder.1} parent=8 // pred_fallthru
          _
      $region9: #{linear_patch_encoder.1} parent=4 // pred_fallthru
        _
      %107 = vnop
    $region5: #{linear_patch_encoder.1} parent=1 // pred_fallthru
      _
    // Predicated region
    $region40: #{linear_patch_encoder.1} parent=1 // pred_check
      _
    $region41: #{linear_patch_encoder.1} parent=1 // pred_check_branch
      %109 = sbr.rel (0) target = $region43
    $region42: #{linear_patch_encoder.1} parent=1 // pred_region
      _
    $region43: #{linear_patch_encoder.1} parent=1 // pred_fallthru
      _
    // Predicated region
    $region44: #{linear_patch_encoder.1} parent=1 // pred_check
      _
    $region45: #{linear_patch_encoder.1} parent=1 // pred_check_branch
      %111 = sbr.rel (0) target = $region47
    $region46: #{linear_patch_encoder.1} parent=1 // pred_region
      _
    $region47: #{linear_patch_encoder.1} parent=1 // pred_fallthru
      _
    // Predicated region
    $region48: #{linear_patch_encoder.1} parent=1 // pred_check
      _
    $region49: #{linear_patch_encoder.1} parent=1 // pred_check_branch
      %113 = sbr.rel (0) target = $region51
    $region50: #{linear_patch_encoder.1} parent=1 // pred_region
      _
    $region51: #{linear_patch_encoder.1} parent=1 // pred_fallthru
      _
    // Predicated region
    $region52: #{linear_patch_encoder.1} parent=1 // pred_check
      _
    $region53: #{linear_patch_encoder.1} parent=1 // pred_check_branch
      %115 = sbr.rel (0) target = $region55
    $region54: #{linear_patch_encoder.1} parent=1 // pred_region
      _
    $region55: #{linear_patch_encoder.1} parent=1 // pred_fallthru
      _
    // Predicated region
    $region56: #{linear_patch_encoder.1} parent=1 // pred_check
      _
    $region57: #{linear_patch_encoder.1} parent=1 // pred_check_branch
      %117 = sbr.rel (0) target = $region59
    $region58: #{linear_patch_encoder.1} parent=1 // pred_region
      _
    $region59: #{linear_patch_encoder.1} parent=1 // pred_fallthru
      _
    // Predicated region
    $region60: #{linear_patch_encoder.1} parent=1 // pred_check
      _
    $region61: #{linear_patch_encoder.1} parent=1 // pred_check_branch
      %119 = sbr.rel (0) target = $region63
    $region62: #{linear_patch_encoder.1} parent=1 // pred_region
      _
    $region63: #{linear_patch_encoder.1} parent=1 // pred_fallthru
      _
    // Predicated region
    $region64: #{linear_patch_encoder.1} parent=1 // pred_check
      _
    $region65: #{linear_patch_encoder.1} parent=1 // pred_check_branch
      %121 = sbr.rel (0) target = $region67
    $region66: #{linear_patch_encoder.1} parent=1 // pred_region
      _
    $region67: #{linear_patch_encoder.1} parent=1 // pred_fallthru
      _
    %v122 = vld [vmem:[#allocation2] sm:$0xff]
    %v123 = vld [vmem:[#allocation2 + $0x8] sm:$0xff]
    %v124 = vld [vmem:[#allocation2 + $0x10] sm:$0xff]
    %v125 = vld [vmem:[#allocation2 + $0x18] sm:$0xff]
    %v126 = vld [vmem:[#allocation2 + $0x20] sm:$0xff]
    %v127 = vld [vmem:[#allocation2 + $0x28] sm:$0xff]
    %v128 = vld [vmem:[#allocation2 + $0x30] sm:$0xff]
    %v129 = vld [vmem:[#allocation2 + $0x38] sm:$0xff]
    %v130 = vld [vmem:[#allocation2 + $0x40] sm:$0xff]
    %v131 = vld [vmem:[#allocation2 + $0x48] sm:$0xff]
    %v132 = vld [vmem:[#allocation2 + $0x50] sm:$0xff]
    %v133 = vld [vmem:[#allocation2 + $0x58] sm:$0xff]
    %v134 = vld [vmem:[#allocation2 + $0x60] sm:$0xff]
    %v135 = vld [vmem:[#allocation2 + $0x68] sm:$0xff]
    %v136 = vld [vmem:[#allocation2 + $0x70] sm:$0xff]
    %v137 = vld [vmem:[#allocation2 + $0x78] sm:$0xff]
    %vm138 = vcmask 130048
    %v139 = vsel %vm138, %v122, 0.0
    %140 = vadd.xlane.f32.xlu0 %v139
    %v141 = vpop.xlane.xlu0 %140
    %v142 = vsel %vm138, %v123, 0.0
    %143 = vadd.xlane.f32.xlu0 %v142
    %v144 = vpop.xlane.xlu0 %143
    %v145 = vsel %vm138, %v124, 0.0
    %146 = vadd.xlane.f32.xlu0 %v145
    %v147 = vpop.xlane.xlu0 %146
    %v148 = vsel %vm138, %v125, 0.0
    %149 = vadd.xlane.f32.xlu0 %v148
    %v150 = vpop.xlane.xlu0 %149
    %v151 = vsel %vm138, %v126, 0.0
    %152 = vadd.xlane.f32.xlu0 %v151
    %v153 = vpop.xlane.xlu0 %152
    %v154 = vsel %vm138, %v127, 0.0
    %155 = vadd.xlane.f32.xlu0 %v154
    %v156 = vpop.xlane.xlu0 %155
    %v157 = vsel %vm138, %v128, 0.0
    %158 = vadd.xlane.f32.xlu0 %v157
    %v159 = vpop.xlane.xlu0 %158
    %v160 = vsel %vm138, %v129, 0.0
    %161 = vadd.xlane.f32.xlu0 %v160
    %v162 = vpop.xlane.xlu0 %161
    %v163 = vsel %vm138, %v130, 0.0
    %164 = vadd.xlane.f32.xlu0 %v163
    %v165 = vpop.xlane.xlu0 %164
    %v166 = vsel %vm138, %v131, 0.0
    %167 = vadd.xlane.f32.xlu0 %v166
    %v168 = vpop.xlane.xlu0 %167
    %v169 = vsel %vm138, %v132, 0.0
    %170 = vadd.xlane.f32.xlu0 %v169
    %v171 = vpop.xlane.xlu0 %170
    %v172 = vsel %vm138, %v133, 0.0
    %173 = vadd.xlane.f32.xlu0 %v172
    %v174 = vpop.xlane.xlu0 %173
    %v175 = vsel %vm138, %v134, 0.0
    %176 = vadd.xlane.f32.xlu0 %v175
    %v177 = vpop.xlane.xlu0 %176
    %v178 = vsel %vm138, %v135, 0.0
    %179 = vadd.xlane.f32.xlu0 %v178
    %v180 = vpop.xlane.xlu0 %179
    %v181 = vsel %vm138, %v136, 0.0
    %182 = vadd.xlane.f32.xlu0 %v181
    %v183 = vpop.xlane.xlu0 %182
    %v184 = vsel %vm138, %v137, 0.0
    %185 = vadd.xlane.f32.xlu0 %v184
    %v186 = vpop.xlane.xlu0 %185
    %v187 = vrcp.pop 16.0
    %v188 = vmul.f32 %v141, %v187
    %v189 = vmul.f32 %v144, %v187
    %v190 = vmul.f32 %v147, %v187
    %v191 = vmul.f32 %v150, %v187
    %v192 = vmul.f32 %v153, %v187
    %v193 = vmul.f32 %v156, %v187
    %v194 = vmul.f32 %v159, %v187
    %v195 = vmul.f32 %v162, %v187
    %v196 = vmul.f32 %v165, %v187
    %v197 = vmul.f32 %v168, %v187
    %v198 = vmul.f32 %v171, %v187
    %v199 = vmul.f32 %v174, %v187
    %v200 = vmul.f32 %v177, %v187
    %v201 = vmul.f32 %v180, %v187
    %v202 = vmul.f32 %v183, %v187
    %v203 = vmul.f32 %v186, %v187
    %v204 = vsub.f32 %v122, %v188
    %v205 = vsub.f32 %v123, %v189
    %v206 = vsub.f32 %v124, %v190
    %v207 = vsub.f32 %v125, %v191
    %v208 = vsub.f32 %v126, %v192
    %v209 = vsub.f32 %v127, %v193
    %v210 = vsub.f32 %v128, %v194
    %v211 = vsub.f32 %v129, %v195
    %v212 = vsub.f32 %v130, %v196
    %v213 = vsub.f32 %v131, %v197
    %v214 = vsub.f32 %v132, %v198
    %v215 = vsub.f32 %v133, %v199
    %v216 = vsub.f32 %v134, %v200
    %v217 = vsub.f32 %v135, %v201
    %v218 = vsub.f32 %v136, %v202
    %v219 = vsub.f32 %v137, %v203
    %v220 = vmul.f32 %v204, %v204
    %v221 = vmul.f32 %v205, %v205
    %v222 = vmul.f32 %v206, %v206
    %v223 = vmul.f32 %v207, %v207
    %v224 = vmul.f32 %v208, %v208
    %v225 = vmul.f32 %v209, %v209
    %v226 = vmul.f32 %v210, %v210
    %v227 = vmul.f32 %v211, %v211
    %v228 = vmul.f32 %v212, %v212
    %v229 = vmul.f32 %v213, %v213
    %v230 = vmul.f32 %v214, %v214
    %v231 = vmul.f32 %v215, %v215
    %v232 = vmul.f32 %v216, %v216
    %v233 = vmul.f32 %v217, %v217
    %v234 = vmul.f32 %v218, %v218
    %v235 = vmul.f32 %v219, %v219
    %v236 = vsel %vm138, %v220, 0.0
    %237 = vadd.xlane.f32.xlu0 %v236
    %v238 = vpop.xlane.xlu0 %237
    %v239 = vsel %vm138, %v221, 0.0
    %240 = vadd.xlane.f32.xlu0 %v239
    %v241 = vpop.xlane.xlu0 %240
    %v242 = vsel %vm138, %v222, 0.0
    %243 = vadd.xlane.f32.xlu0 %v242
    %v244 = vpop.xlane.xlu0 %243
    %v245 = vsel %vm138, %v223, 0.0
    %246 = vadd.xlane.f32.xlu0 %v245
    %v247 = vpop.xlane.xlu0 %246
    %v248 = vsel %vm138, %v224, 0.0
    %249 = vadd.xlane.f32.xlu0 %v248
    %v250 = vpop.xlane.xlu0 %249
    %v251 = vsel %vm138, %v225, 0.0
    %252 = vadd.xlane.f32.xlu0 %v251
    %v253 = vpop.xlane.xlu0 %252
    %v254 = vsel %vm138, %v226, 0.0
    %255 = vadd.xlane.f32.xlu0 %v254
    %v256 = vpop.xlane.xlu0 %255
    %v257 = vsel %vm138, %v227, 0.0
    %258 = vadd.xlane.f32.xlu0 %v257
    %v259 = vpop.xlane.xlu0 %258
    %v260 = vsel %vm138, %v228, 0.0
    %261 = vadd.xlane.f32.xlu0 %v260
    %v262 = vpop.xlane.xlu0 %261
    %v263 = vsel %vm138, %v229, 0.0
    %264 = vadd.xlane.f32.xlu0 %v263
    %v265 = vpop.xlane.xlu0 %264
    %v266 = vsel %vm138, %v230, 0.0
    %267 = vadd.xlane.f32.xlu0 %v266
    %v268 = vpop.xlane.xlu0 %267
    %v269 = vsel %vm138, %v231, 0.0
    %270 = vadd.xlane.f32.xlu0 %v269
    %v271 = vpop.xlane.xlu0 %270
    %v272 = vsel %vm138, %v232, 0.0
    %273 = vadd.xlane.f32.xlu0 %v272
    %v274 = vpop.xlane.xlu0 %273
    %v275 = vsel %vm138, %v233, 0.0
    %276 = vadd.xlane.f32.xlu0 %v275
    %v277 = vpop.xlane.xlu0 %276
    %v278 = vsel %vm138, %v234, 0.0
    %279 = vadd.xlane.f32.xlu0 %v278
    %v280 = vpop.xlane.xlu0 %279
    %v281 = vsel %vm138, %v235, 0.0
    %282 = vadd.xlane.f32.xlu0 %v281
    %v283 = vpop.xlane.xlu0 %282
    %v284 = vmul.f32 %v238, %v187
    %v285 = vmul.f32 %v241, %v187
    %v286 = vmul.f32 %v244, %v187
    %v287 = vmul.f32 %v247, %v187
    %v288 = vmul.f32 %v250, %v187
    %v289 = vmul.f32 %v253, %v187
    %v290 = vmul.f32 %v256, %v187
    %v291 = vmul.f32 %v259, %v187
    %v292 = vmul.f32 %v262, %v187
    %v293 = vmul.f32 %v265, %v187
    %v294 = vmul.f32 %v268, %v187
    %v295 = vmul.f32 %v271, %v187
    %v296 = vmul.f32 %v274, %v187
    %v297 = vmul.f32 %v277, %v187
    %v298 = vmul.f32 %v280, %v187
    %v299 = vmul.f32 %v283, %v187
    %v300 = vadd.f32 %v284, 1e-05
    %v301 = vadd.f32 %v285, 1e-05
    %v302 = vadd.f32 %v286, 1e-05
    %v303 = vadd.f32 %v287, 1e-05
    %v304 = vadd.f32 %v288, 1e-05
    %v305 = vadd.f32 %v289, 1e-05
    %v306 = vadd.f32 %v290, 1e-05
    %v307 = vadd.f32 %v291, 1e-05
    %v308 = vadd.f32 %v292, 1e-05
    %v309 = vadd.f32 %v293, 1e-05
    %v310 = vadd.f32 %v294, 1e-05
    %v311 = vadd.f32 %v295, 1e-05
    %v312 = vadd.f32 %v296, 1e-05
    %v313 = vadd.f32 %v297, 1e-05
    %v314 = vadd.f32 %v298, 1e-05
    %v315 = vadd.f32 %v299, 1e-05
    %v316 = vrsqrt.pop %v300
    %v317 = vrsqrt.pop %v301
    %v318 = vrsqrt.pop %v302
    %v319 = vrsqrt.pop %v303
    %v320 = vrsqrt.pop %v304
    %v321 = vrsqrt.pop %v305
    %v322 = vrsqrt.pop %v306
    %v323 = vrsqrt.pop %v307
    %v324 = vrsqrt.pop %v308
    %v325 = vrsqrt.pop %v309
    %v326 = vrsqrt.pop %v310
    %v327 = vrsqrt.pop %v311
    %v328 = vrsqrt.pop %v312
    %v329 = vrsqrt.pop %v313
    %v330 = vrsqrt.pop %v314
    %v331 = vrsqrt.pop %v315
    %v332 = vmul.f32 %v204, %v316
    %v333 = vmul.f32 %v205, %v317
    %v334 = vmul.f32 %v206, %v318
    %v335 = vmul.f32 %v207, %v319
    %v336 = vmul.f32 %v208, %v320
    %v337 = vmul.f32 %v209, %v321
    %v338 = vmul.f32 %v210, %v322
    %v339 = vmul.f32 %v211, %v323
    %v340 = vmul.f32 %v212, %v324
    %v341 = vmul.f32 %v213, %v325
    %v342 = vmul.f32 %v214, %v326
    %v343 = vmul.f32 %v215, %v327
    %v344 = vmul.f32 %v216, %v328
    %v345 = vmul.f32 %v217, %v329
    %v346 = vmul.f32 %v218, %v330
    %v347 = vmul.f32 %v219, %v331
    %v348 = vld [vmem:[%s3] sm:$0x1]
    %v350 = vlaneseq
    %v351 = vshrl.u32 %v350, 7
    %v352 = vsub.s32 0, %v351
    %v353 = vrot.slane %v348, %v352
    %v355 = vmul.f32 %v332, %v353
    %v356 = vmul.f32 %v333, %v353
    %v357 = vmul.f32 %v334, %v353
    %v358 = vmul.f32 %v335, %v353
    %v359 = vmul.f32 %v336, %v353
    %v360 = vmul.f32 %v337, %v353
    %v361 = vmul.f32 %v338, %v353
    %v362 = vmul.f32 %v339, %v353
    %v363 = vmul.f32 %v340, %v353
    %v364 = vmul.f32 %v341, %v353
    %v365 = vmul.f32 %v342, %v353
    %v366 = vmul.f32 %v343, %v353
    %v367 = vmul.f32 %v344, %v353
    %v368 = vmul.f32 %v345, %v353
    %v369 = vmul.f32 %v346, %v353
    %v370 = vmul.f32 %v347, %v353
    %v371 = vld [vmem:[%s4] sm:$0x1]
    %v373 = vlaneseq
    %v374 = vshrl.u32 %v373, 7
    %v375 = vsub.s32 0, %v374
    %v376 = vrot.slane %v371, %v375
    %v378 = vadd.f32 %v355, %v376
    %v379 = vadd.f32 %v356, %v376
    %v380 = vadd.f32 %v357, %v376
    %v381 = vadd.f32 %v358, %v376
    %v382 = vadd.f32 %v359, %v376
    %v383 = vadd.f32 %v360, %v376
    %v384 = vadd.f32 %v361, %v376
    %v385 = vadd.f32 %v362, %v376
    %v386 = vadd.f32 %v363, %v376
    %v387 = vadd.f32 %v364, %v376
    %v388 = vadd.f32 %v365, %v376
    %v389 = vadd.f32 %v366, %v376
    %v390 = vadd.f32 %v367, %v376
    %v391 = vadd.f32 %v368, %v376
    %v392 = vadd.f32 %v369, %v376
    %v393 = vadd.f32 %v370, %v376
    %v394 = vld [vmem:[%s1] sm:$0xff]
    %v395 = vld [vmem:[%s1 + $0x8] sm:$0xff]
    %v396 = vld [vmem:[%s2] sm:$0x1]
    %v398 = vlaneseq
    %v399 = vshrl.u32 %v398, 7
    %v400 = vsub.s32 0, %v399
    %v401 = vrot.slane %v396, %v400
    %v404 = vsel %vm138, %v378, 0
    %v407 = vsel %vm138, %v379, 0
    %v410 = vsel %vm138, %v380, 0
    %v413 = vsel %vm138, %v381, 0
    %v416 = vsel %vm138, %v382, 0
    %v419 = vsel %vm138, %v383, 0
    %v422 = vsel %vm138, %v384, 0
    %v425 = vsel %vm138, %v385, 0
    %v428 = vsel %vm138, %v386, 0
    %v431 = vsel %vm138, %v387, 0
    %v434 = vsel %vm138, %v388, 0
    %v437 = vsel %vm138, %v389, 0
    %v440 = vsel %vm138, %v390, 0
    %v443 = vsel %vm138, %v391, 0
    %v446 = vsel %vm138, %v392, 0
    %v449 = vsel %vm138, %v393, 0
    %451 = vmatprep.subr.mxu0 0.0
    %452 = vmatpush1.msra.mxu0 %v394
    %453 = vmatprep.subr.mxu0 0.0
    %454 = vmatpush1.msra.mxu0 %v395
    %455 = vmatprep.subr.mxu0 0.0
    %456 = vmatpush1.msra.mxu0 0.0
    %457 = vmatprep.subr.mxu0 0.0
    %458 = vmatpush1.msra.mxu0 0.0
    %459 = vmatprep.subr.mxu0 0.0
    %460 = vmatpush1.msra.mxu0 0.0
    %461 = vmatprep.subr.mxu0 0.0
    %462 = vmatpush1.msra.mxu0 0.0
    %463 = vmatprep.subr.mxu0 0.0
    %464 = vmatpush1.msra.mxu0 0.0
    %465 = vmatprep.subr.mxu0 0.0
    %466 = vmatpush1.msra.mxu0 0.0
    %467 = vmatprep.subr.mxu0 0.0
    %468 = vmatpush1.msra.mxu0 0.0
    %469 = vmatprep.subr.mxu0 0.0
    %470 = vmatpush1.msra.mxu0 0.0
    %471 = vmatprep.subr.mxu0 0.0
    %472 = vmatpush1.msra.mxu0 0.0
    %473 = vmatprep.subr.mxu0 0.0
    %474 = vmatpush1.msra.mxu0 0.0
    %475 = vmatprep.subr.mxu0 0.0
    %476 = vmatpush1.msra.mxu0 0.0
    %477 = vmatprep.subr.mxu0 0.0
    %478 = vmatpush1.msra.mxu0 0.0
    %479 = vmatprep.subr.mxu0 0.0
    %480 = vmatpush1.msra.mxu0 0.0
    %481 = vmatprep.subr.mxu0 0.0
    %482 = vmatpush1.msra.mxu0 0.0
    %483 = vmatprep.subr.mxu0 0.0
    %484 = vmatpush1.msra.mxu0 0.0
    %485 = vmatprep.subr.mxu0 0.0
    %486 = vmatpush1.msra.mxu0 0.0
    %487 = vmatprep.subr.mxu0 0.0
    %488 = vmatpush1.msra.mxu0 0.0
    %489 = vmatprep.subr.mxu0 0.0
    %490 = vmatpush1.msra.mxu0 0.0
    %491 = vmatprep.subr.mxu0 0.0
    %492 = vmatpush1.msra.mxu0 0.0
    %493 = vmatprep.subr.mxu0 0.0
    %494 = vmatpush1.msra.mxu0 0.0
    %495 = vmatprep.subr.mxu0 0.0
    %496 = vmatpush1.msra.mxu0 0.0
    %497 = vmatprep.subr.mxu0 0.0
    %498 = vmatpush1.msra.mxu0 0.0
    %499 = vmatprep.subr.mxu0 0.0
    %500 = vmatpush1.msra.mxu0 0.0
    %501 = vmatprep.subr.mxu0 0.0
    %502 = vmatpush1.msra.mxu0 0.0
    %503 = vmatprep.subr.mxu0 0.0
    %504 = vmatpush1.msra.mxu0 0.0
    %505 = vmatprep.subr.mxu0 0.0
    %506 = vmatpush1.msra.mxu0 0.0
    %507 = vmatprep.subr.mxu0 0.0
    %508 = vmatpush1.msra.mxu0 0.0
    %509 = vmatprep.subr.mxu0 0.0
    %510 = vmatpush1.msra.mxu0 0.0
    %511 = vmatprep.subr.mxu0 0.0
    %512 = vmatpush1.msra.mxu0 0.0
    %513 = vmatprep.subr.mxu0 0.0
    %514 = vmatpush1.msra.mxu0 0.0
    %515 = vmatprep.mubr.f32.mxu0 0.0
    %516 = vmatmul.mubr.f32.gmra.mrb[0].mxu0 %v404
    %v517 = vpop.f32.mrb[0].mxu0
    %v518 = vadd.f32 %v401, %v517
    %v519 = vpop.f32.mrb[0].mxu0
    %520 = vmatprep.mubr.f32.mxu0 0.0
    %521 = vmatmul.mubr.f32.gmra.mrb[0].mxu0 %v407
    %v522 = vpop.f32.mrb[0].mxu0
    %v523 = vadd.f32 %v401, %v522
    %v524 = vpop.f32.mrb[0].mxu0
    %525 = vmatprep.mubr.f32.mxu0 0.0
    %526 = vmatmul.mubr.f32.gmra.mrb[0].mxu0 %v410
    %v527 = vpop.f32.mrb[0].mxu0
    %v528 = vadd.f32 %v401, %v527
    %v529 = vpop.f32.mrb[0].mxu0
    %530 = vmatprep.mubr.f32.mxu0 0.0
    %531 = vmatmul.mubr.f32.gmra.mrb[0].mxu0 %v413
    %v532 = vpop.f32.mrb[0].mxu0
    %v533 = vadd.f32 %v401, %v532
    %v534 = vpop.f32.mrb[0].mxu0
    %535 = vmatprep.mubr.f32.mxu0 0.0
    %536 = vmatmul.mubr.f32.gmra.mrb[0].mxu0 %v416
    %v537 = vpop.f32.mrb[0].mxu0
    %v538 = vadd.f32 %v401, %v537
    %v539 = vpop.f32.mrb[0].mxu0
    %540 = vmatprep.mubr.f32.mxu0 0.0
    %541 = vmatmul.mubr.f32.gmra.mrb[0].mxu0 %v419
    %v542 = vpop.f32.mrb[0].mxu0
    %v543 = vadd.f32 %v401, %v542
    %v544 = vpop.f32.mrb[0].mxu0
    %545 = vmatprep.mubr.f32.mxu0 0.0
    %546 = vmatmul.mubr.f32.gmra.mrb[0].mxu0 %v422
    %v547 = vpop.f32.mrb[0].mxu0
    %v548 = vadd.f32 %v401, %v547
    %v549 = vpop.f32.mrb[0].mxu0
    %550 = vmatprep.mubr.f32.mxu0 0.0
    %551 = vmatmul.mubr.f32.gmra.mrb[0].mxu0 %v425
    %v552 = vpop.f32.mrb[0].mxu0
    %v553 = vadd.f32 %v401, %v552
    %v554 = vpop.f32.mrb[0].mxu0
    %555 = vmatprep.mubr.f32.mxu0 0.0
    %556 = vmatmul.mubr.f32.gmra.mrb[0].mxu0 %v428
    %v557 = vpop.f32.mrb[0].mxu0
    %v558 = vadd.f32 %v401, %v557
    %v559 = vpop.f32.mrb[0].mxu0
    %560 = vmatprep.mubr.f32.mxu0 0.0
    %561 = vmatmul.mubr.f32.gmra.mrb[0].mxu0 %v431
    %v562 = vpop.f32.mrb[0].mxu0
    %v563 = vadd.f32 %v401, %v562
    %v564 = vpop.f32.mrb[0].mxu0
    %565 = vmatprep.mubr.f32.mxu0 0.0
    %566 = vmatmul.mubr.f32.gmra.mrb[0].mxu0 %v434
    %v567 = vpop.f32.mrb[0].mxu0
    %v568 = vadd.f32 %v401, %v567
    %v569 = vpop.f32.mrb[0].mxu0
    %570 = vmatprep.mubr.f32.mxu0 0.0
    %571 = vmatmul.mubr.f32.gmra.mrb[0].mxu0 %v437
    %v572 = vpop.f32.mrb[0].mxu0
    %v573 = vadd.f32 %v401, %v572
    %v574 = vpop.f32.mrb[0].mxu0
    %575 = vmatprep.mubr.f32.mxu0 0.0
    %576 = vmatmul.mubr.f32.gmra.mrb[0].mxu0 %v440
    %v577 = vpop.f32.mrb[0].mxu0
    %v578 = vadd.f32 %v401, %v577
    %v579 = vpop.f32.mrb[0].mxu0
    %580 = vmatprep.mubr.f32.mxu0 0.0
    %581 = vmatmul.mubr.f32.gmra.mrb[0].mxu0 %v443
    %v582 = vpop.f32.mrb[0].mxu0
    %v583 = vadd.f32 %v401, %v582
    %v584 = vpop.f32.mrb[0].mxu0
    %585 = vmatprep.mubr.f32.mxu0 0.0
    %586 = vmatmul.mubr.f32.gmra.mrb[0].mxu0 %v446
    %v587 = vpop.f32.mrb[0].mxu0
    %v588 = vadd.f32 %v401, %v587
    %v589 = vpop.f32.mrb[0].mxu0
    %590 = vmatprep.mubr.f32.mxu0 0.0
    %591 = vmatmul.mubr.f32.gmra.mrb[0].mxu0 %v449
    %v592 = vpop.f32.mrb[0].mxu0
    %v593 = vadd.f32 %v401, %v592
    %v594 = vpop.f32.mrb[0].mxu0
    %595 = vdwg.mxu0
    %596 = vadd.xlane.f32.xlu0 %v518
    %v597 = vpop.xlane.xlu0 %596
    %598 = vadd.xlane.f32.xlu0 %v523
    %v599 = vpop.xlane.xlu0 %598
    %600 = vadd.xlane.f32.xlu0 %v528
    %v601 = vpop.xlane.xlu0 %600
    %602 = vadd.xlane.f32.xlu0 %v533
    %v603 = vpop.xlane.xlu0 %602
    %604 = vadd.xlane.f32.xlu0 %v538
    %v605 = vpop.xlane.xlu0 %604
    %606 = vadd.xlane.f32.xlu0 %v543
    %v607 = vpop.xlane.xlu0 %606
    %608 = vadd.xlane.f32.xlu0 %v548
    %v609 = vpop.xlane.xlu0 %608
    %610 = vadd.xlane.f32.xlu0 %v553
    %v611 = vpop.xlane.xlu0 %610
    %612 = vadd.xlane.f32.xlu0 %v558
    %v613 = vpop.xlane.xlu0 %612
    %614 = vadd.xlane.f32.xlu0 %v563
    %v615 = vpop.xlane.xlu0 %614
    %616 = vadd.xlane.f32.xlu0 %v568
    %v617 = vpop.xlane.xlu0 %616
    %618 = vadd.xlane.f32.xlu0 %v573
    %v619 = vpop.xlane.xlu0 %618
    %620 = vadd.xlane.f32.xlu0 %v578
    %v621 = vpop.xlane.xlu0 %620
    %622 = vadd.xlane.f32.xlu0 %v583
    %v623 = vpop.xlane.xlu0 %622
    %624 = vadd.xlane.f32.xlu0 %v588
    %v625 = vpop.xlane.xlu0 %624
    %626 = vadd.xlane.f32.xlu0 %v593
    %v627 = vpop.xlane.xlu0 %626
    %v628 = vrcp.pop 128.0
    %v629 = vmul.f32 %v597, %v628
    %v630 = vmul.f32 %v599, %v628
    %v631 = vmul.f32 %v601, %v628
    %v632 = vmul.f32 %v603, %v628
    %v633 = vmul.f32 %v605, %v628
    %v634 = vmul.f32 %v607, %v628
    %v635 = vmul.f32 %v609, %v628
    %v636 = vmul.f32 %v611, %v628
    %v637 = vmul.f32 %v613, %v628
    %v638 = vmul.f32 %v615, %v628
    %v639 = vmul.f32 %v617, %v628
    %v640 = vmul.f32 %v619, %v628
    %v641 = vmul.f32 %v621, %v628
    %v642 = vmul.f32 %v623, %v628
    %v643 = vmul.f32 %v625, %v628
    %v644 = vmul.f32 %v627, %v628
    %v645 = vsub.f32 %v518, %v629
    %v646 = vsub.f32 %v523, %v630
    %v647 = vsub.f32 %v528, %v631
    %v648 = vsub.f32 %v533, %v632
    %v649 = vsub.f32 %v538, %v633
    %v650 = vsub.f32 %v543, %v634
    %v651 = vsub.f32 %v548, %v635
    %v652 = vsub.f32 %v553, %v636
    %v653 = vsub.f32 %v558, %v637
    %v654 = vsub.f32 %v563, %v638
    %v655 = vsub.f32 %v568, %v639
    %v656 = vsub.f32 %v573, %v640
    %v657 = vsub.f32 %v578, %v641
    %v658 = vsub.f32 %v583, %v642
    %v659 = vsub.f32 %v588, %v643
    %v660 = vsub.f32 %v593, %v644
    %v661 = vmul.f32 %v645, %v645
    %v662 = vmul.f32 %v646, %v646
    %v663 = vmul.f32 %v647, %v647
    %v664 = vmul.f32 %v648, %v648
    %v665 = vmul.f32 %v649, %v649
    %v666 = vmul.f32 %v650, %v650
    %v667 = vmul.f32 %v651, %v651
    %v668 = vmul.f32 %v652, %v652
    %v669 = vmul.f32 %v653, %v653
    %v670 = vmul.f32 %v654, %v654
    %v671 = vmul.f32 %v655, %v655
    %v672 = vmul.f32 %v656, %v656
    %v673 = vmul.f32 %v657, %v657
    %v674 = vmul.f32 %v658, %v658
    %v675 = vmul.f32 %v659, %v659
    %v676 = vmul.f32 %v660, %v660
    %677 = vadd.xlane.f32.xlu0 %v661
    %v678 = vpop.xlane.xlu0 %677
    %679 = vadd.xlane.f32.xlu0 %v662
    %v680 = vpop.xlane.xlu0 %679
    %681 = vadd.xlane.f32.xlu0 %v663
    %v682 = vpop.xlane.xlu0 %681
    %683 = vadd.xlane.f32.xlu0 %v664
    %v684 = vpop.xlane.xlu0 %683
    %685 = vadd.xlane.f32.xlu0 %v665
    %v686 = vpop.xlane.xlu0 %685
    %687 = vadd.xlane.f32.xlu0 %v666
    %v688 = vpop.xlane.xlu0 %687
    %689 = vadd.xlane.f32.xlu0 %v667
    %v690 = vpop.xlane.xlu0 %689
    %691 = vadd.xlane.f32.xlu0 %v668
    %v692 = vpop.xlane.xlu0 %691
    %693 = vadd.xlane.f32.xlu0 %v669
    %v694 = vpop.xlane.xlu0 %693
    %695 = vadd.xlane.f32.xlu0 %v670
    %v696 = vpop.xlane.xlu0 %695
    %697 = vadd.xlane.f32.xlu0 %v671
    %v698 = vpop.xlane.xlu0 %697
    %699 = vadd.xlane.f32.xlu0 %v672
    %v700 = vpop.xlane.xlu0 %699
    %701 = vadd.xlane.f32.xlu0 %v673
    %v702 = vpop.xlane.xlu0 %701
    %703 = vadd.xlane.f32.xlu0 %v674
    %v704 = vpop.xlane.xlu0 %703
    %705 = vadd.xlane.f32.xlu0 %v675
    %v706 = vpop.xlane.xlu0 %705
    %707 = vadd.xlane.f32.xlu0 %v676
    %v708 = vpop.xlane.xlu0 %707
    %v709 = vmul.f32 %v678, %v628
    %v710 = vmul.f32 %v680, %v628
    %v711 = vmul.f32 %v682, %v628
    %v712 = vmul.f32 %v684, %v628
    %v713 = vmul.f32 %v686, %v628
    %v714 = vmul.f32 %v688, %v628
    %v715 = vmul.f32 %v690, %v628
    %v716 = vmul.f32 %v692, %v628
    %v717 = vmul.f32 %v694, %v628
    %v718 = vmul.f32 %v696, %v628
    %v719 = vmul.f32 %v698, %v628
    %v720 = vmul.f32 %v700, %v628
    %v721 = vmul.f32 %v702, %v628
    %v722 = vmul.f32 %v704, %v628
    %v723 = vmul.f32 %v706, %v628
    %v724 = vmul.f32 %v708, %v628
    %v725 = vadd.f32 %v709, 1e-05
    %v726 = vadd.f32 %v710, 1e-05
    %v727 = vadd.f32 %v711, 1e-05
    %v728 = vadd.f32 %v712, 1e-05
    %v729 = vadd.f32 %v713, 1e-05
    %v730 = vadd.f32 %v714, 1e-05
    %v731 = vadd.f32 %v715, 1e-05
    %v732 = vadd.f32 %v716, 1e-05
    %v733 = vadd.f32 %v717, 1e-05
    %v734 = vadd.f32 %v718, 1e-05
    %v735 = vadd.f32 %v719, 1e-05
    %v736 = vadd.f32 %v720, 1e-05
    %v737 = vadd.f32 %v721, 1e-05
    %v738 = vadd.f32 %v722, 1e-05
    %v739 = vadd.f32 %v723, 1e-05
    %v740 = vadd.f32 %v724, 1e-05
    %v741 = vrsqrt.pop %v725
    %v742 = vrsqrt.pop %v726
    %v743 = vrsqrt.pop %v727
    %v744 = vrsqrt.pop %v728
    %v745 = vrsqrt.pop %v729
    %v746 = vrsqrt.pop %v730
    %v747 = vrsqrt.pop %v731
    %v748 = vrsqrt.pop %v732
    %v749 = vrsqrt.pop %v733
    %v750 = vrsqrt.pop %v734
    %v751 = vrsqrt.pop %v735
    %v752 = vrsqrt.pop %v736
    %v753 = vrsqrt.pop %v737
    %v754 = vrsqrt.pop %v738
    %v755 = vrsqrt.pop %v739
    %v756 = vrsqrt.pop %v740
    %v757 = vmul.f32 %v645, %v741
    %v758 = vmul.f32 %v646, %v742
    %v759 = vmul.f32 %v647, %v743
    %v760 = vmul.f32 %v648, %v744
    %v761 = vmul.f32 %v649, %v745
    %v762 = vmul.f32 %v650, %v746
    %v763 = vmul.f32 %v651, %v747
    %v764 = vmul.f32 %v652, %v748
    %v765 = vmul.f32 %v653, %v749
    %v766 = vmul.f32 %v654, %v750
    %v767 = vmul.f32 %v655, %v751
    %v768 = vmul.f32 %v656, %v752
    %v769 = vmul.f32 %v657, %v753
    %v770 = vmul.f32 %v658, %v754
    %v771 = vmul.f32 %v659, %v755
    %v772 = vmul.f32 %v660, %v756
    %v773 = vld [vmem:[%s5] sm:$0x1]
    %v775 = vlaneseq
    %v776 = vshrl.u32 %v775, 7
    %v777 = vsub.s32 0, %v776
    %v778 = vrot.slane %v773, %v777
    %v780 = vmul.f32 %v757, %v778
    %v781 = vmul.f32 %v758, %v778
    %v782 = vmul.f32 %v759, %v778
    %v783 = vmul.f32 %v760, %v778
    %v784 = vmul.f32 %v761, %v778
    %v785 = vmul.f32 %v762, %v778
    %v786 = vmul.f32 %v763, %v778
    %v787 = vmul.f32 %v764, %v778
    %v788 = vmul.f32 %v765, %v778
    %v789 = vmul.f32 %v766, %v778
    %v790 = vmul.f32 %v767, %v778
    %v791 = vmul.f32 %v768, %v778
    %v792 = vmul.f32 %v769, %v778
    %v793 = vmul.f32 %v770, %v778
    %v794 = vmul.f32 %v771, %v778
    %v795 = vmul.f32 %v772, %v778
    %v796 = vld [vmem:[%s6] sm:$0x1]
    %v798 = vlaneseq
    %v799 = vshrl.u32 %v798, 7
    %v800 = vsub.s32 0, %v799
    %v801 = vrot.slane %v796, %v800
    %v803 = vadd.f32 %v780, %v801
    %v804 = vadd.f32 %v781, %v801
    %v805 = vadd.f32 %v782, %v801
    %v806 = vadd.f32 %v783, %v801
    %v807 = vadd.f32 %v784, %v801
    %v808 = vadd.f32 %v785, %v801
    %v809 = vadd.f32 %v786, %v801
    %v810 = vadd.f32 %v787, %v801
    %v811 = vadd.f32 %v788, %v801
    %v812 = vadd.f32 %v789, %v801
    %v813 = vadd.f32 %v790, %v801
    %v814 = vadd.f32 %v791, %v801
    %v815 = vadd.f32 %v792, %v801
    %v816 = vadd.f32 %v793, %v801
    %v817 = vadd.f32 %v794, %v801
    %v818 = vadd.f32 %v795, %v801
    %819 = vst [vmem:[#allocation3] sm:$0xff] %v803
    %820 = vst [vmem:[#allocation3 + $0x8] sm:$0xff] %v804
    %821 = vst [vmem:[#allocation3 + $0x10] sm:$0xff] %v805
    %822 = vst [vmem:[#allocation3 + $0x18] sm:$0xff] %v806
    %823 = vst [vmem:[#allocation3 + $0x20] sm:$0xff] %v807
    %824 = vst [vmem:[#allocation3 + $0x28] sm:$0xff] %v808
    %825 = vst [vmem:[#allocation3 + $0x30] sm:$0xff] %v809
    %826 = vst [vmem:[#allocation3 + $0x38] sm:$0xff] %v810
    %827 = vst [vmem:[#allocation3 + $0x40] sm:$0xff] %v811
    %828 = vst [vmem:[#allocation3 + $0x48] sm:$0xff] %v812
    %829 = vst [vmem:[#allocation3 + $0x50] sm:$0xff] %v813
    %830 = vst [vmem:[#allocation3 + $0x58] sm:$0xff] %v814
    %831 = vst [vmem:[#allocation3 + $0x60] sm:$0xff] %v815
    %832 = vst [vmem:[#allocation3 + $0x68] sm:$0xff] %v816
    %833 = vst [vmem:[#allocation3 + $0x70] sm:$0xff] %v817
    %834 = vst [vmem:[#allocation3 + $0x78] sm:$0xff] %v818
    // Predicated region
    $region68: #{linear_patch_encoder.1} parent=1 // pred_check
      _
    $region69: #{linear_patch_encoder.1} parent=1 // pred_check_branch
      %836 = sbr.rel (0) target = $region71
    $region70: #{linear_patch_encoder.1} parent=1 // pred_region
      %s838 = ssub.s32 2048, 2048
      %839 = vsyncadd [#allocation4], %s838
      %s840 = sshll.u32 [#allocation3], 4
      %s841 = int_to_ptr.vmem [resolvable:$true] %s840
      %846 = dma.vmem_to_hbm [thread:$0]  %s841, 2048, %s7, [#allocation4], 128, 128, 8
    $region71: #{linear_patch_encoder.1} parent=1 // pred_fallthru
      _
    // Predicated region
    $region72: #{linear_patch_encoder.1} parent=1 // pred_check
      _
    $region73: #{linear_patch_encoder.1} parent=1 // pred_check_branch
      %848 = sbr.rel (0) target = $region75
    $region74: #{linear_patch_encoder.1} parent=1 // pred_region
      %849 = dma.done [#allocation4], 2048
    $region75: #{linear_patch_encoder.1} parent=1 // pred_fallthru
      _
    %850 = vsyncpa [#allocation4], 1

</llo_original>
